<compile_context>
chip_gen: v7x
topology: tpu7x:2x2x1
jax: 0.10.0
libtpu: 0.0.40
codegen_flags: <defaults>
</compile_context>

<pallas_src>
import functools

import jax
import jax.numpy as jnp
from jax import lax
from jax.experimental import pallas as pl
from jax.experimental.pallas import tpu as pltpu


_FASTPATH_LIMIT = 8 * 1024 * 1024    # bytes: use single-step path below this
_VMEM_BUDGET = 40 * 1024 * 1024      # conservative across v5e / v6e / v7x


# ---------------------------------------------------------------------------
# Kernels
# ---------------------------------------------------------------------------

def _kam_fast_kernel(x_ref, y_ref, wv_ref, bv_ref, gamma_ref, beta_ref, o_ref,
                     *, eps):
    """Single-invocation path: whole (B, D) problem resident in VMEM."""
    x = x_ref[...].astype(jnp.float32)
    y = y_ref[...].astype(jnp.float32)
    # Cross_Attn(x, y) == Linear_v(x): softmax over a size-1 key axis == 1.
    h = jnp.dot(x, wv_ref[...].astype(jnp.float32),
                preferred_element_type=jnp.float32)
    h = h + bv_ref[...].astype(jnp.float32)
    z = x - y + h
    # Two-pass (stable) training-mode BatchNorm statistics.
    mu = jnp.mean(z, axis=0, keepdims=True)
    d = z - mu
    var = jnp.mean(d * d, axis=0, keepdims=True)
    rstd = lax.rsqrt(var + jnp.float32(eps))
    scale = gamma_ref[...].astype(jnp.float32) * rstd
    shift = beta_ref[...].astype(jnp.float32) - mu * scale
    o_ref[...] = (z * scale + shift).astype(o_ref.dtype)


def _kam_tiled_kernel(x_ref, y_ref, wv_ref, bv_ref, gamma_ref, beta_ref, o_ref,
                      z_ref, stat_ref, *, batch_size, block_b, eps):
    """Two-phase path.

    Phase 0: project each batch tile, stash z = x - y + h into the VMEM z
             scratch, and accumulate the per-feature sum (free, z is in vregs).
    Phase 1: at b == 0 compute fused BN scale / shift (two-pass variance from
             the z scratch); every tile then reads z back from VMEM and writes
             out = z*scale + shift.  No recompute, no second HBM read of x/y.
    """
    phase = pl.program_id(0)
    b = pl.program_id(1)
    nb = pl.num_programs(1)
    row0 = pl.multiple_of(b * block_b, block_b)

    @pl.when((phase == 0) & (b == 0))
    def _init_sum():
        stat_ref[0:1, :] = jnp.zeros_like(stat_ref[0:1, :])

    @pl.when(phase == 0)
    def _project_and_stash():
        x = x_ref[...].astype(jnp.float32)
        y = y_ref[...].astype(jnp.float32)
        h = jnp.dot(x, wv_ref[...].astype(jnp.float32),
                    preferred_element_type=jnp.float32)
        z = x - y + h + bv_ref[...].astype(jnp.float32)
        z_ref[pl.ds(row0, block_b), :] = z
        stat_ref[0:1, :] += jnp.sum(z, axis=0, keepdims=True)

    @pl.when((phase == 1) & (b == 0))
    def _finalize_stats():
        inv_n = jnp.float32(1.0 / batch_size)
        mu = stat_ref[0:1, :] * inv_n

        def var_body(t, acc):
            start = pl.multiple_of(t * block_b, block_b)
            d = z_ref[pl.ds(start, block_b), :] - mu
            return acc + jnp.sum(d * d, axis=0, keepdims=True)

        var = lax.fori_loop(0, nb, var_body, jnp.zeros_like(mu)) * inv_n
        rstd = lax.rsqrt(var + jnp.float32(eps))
        scale = gamma_ref[...].astype(jnp.float32) * rstd
        stat_ref[0:1, :] = scale
        stat_ref[1:2, :] = beta_ref[...].astype(jnp.float32) - mu * scale

    @pl.when(phase == 1)
    def _normalize():
        z = z_ref[pl.ds(row0, block_b), :]
        o_ref[...] = (z * stat_ref[0:1, :] + stat_ref[1:2, :]).astype(o_ref.dtype)


# ---------------------------------------------------------------------------
# VMEM budgeting / wrapper
# ---------------------------------------------------------------------------

def _tiled_vmem_bytes(B, D, block_b):
    z_scratch = B * D * 4
    weights = 2 * D * D * 4                       # resident Wv^T (double buffer)
    vectors = 2 * 3 * 8 * max(D, 128) * 4         # bv / gamma / beta (padded)
    tiles = 2 * 3 * block_b * D * 4               # x, y, out row tiles (db-buf)
    stats = 8 * max(D, 128) * 4
    return z_scratch + weights + vectors + tiles + stats


def _pick_block_b(B, D, budget):
    cands = [B] + [c for c in (16384, 8192, 4096, 2048, 1024, 512, 256, 128,
                               64, 32, 16, 8) if c < B and B % c == 0]
    for c in cands:  # largest first
        if _tiled_vmem_bytes(B, D, c) <= budget:
            return c
    return None


def knowledge_aug_forward(x, y, wv_t, bv, gamma, beta, *, eps=1e-5,
                          block_b=None, force_tiled=False):
    """out = BatchNorm1d(x - y + Linear_v(x)), training-mode batch statistics."""
    B, D = x.shape
    assert y.shape == (B, D)
    assert wv_t.shape == (D, D)
    bv = bv.reshape(1, D)
    gamma = gamma.reshape(1, D)
    beta = beta.reshape(1, D)

    # ---------------- fast path: one grid step, everything VMEM-resident ----
    fast_bytes = 2 * (3 * B * D * 4 + D * D * 4 + 3 * max(D, 128) * 8 * 4)
    if (not force_tiled) and block_b is None and fast_bytes <= _FASTPATH_LIMIT:
        kernel = functools.partial(_kam_fast_kernel, eps=eps)
        full = lambda shape: pl.BlockSpec(shape, lambda i: (0, 0))
        return pl.pallas_call(
            kernel,
            out_shape=jax.ShapeDtypeStruct((B, D), x.dtype),
            grid_spec=pltpu.PrefetchScalarGridSpec(
                num_scalar_prefetch=0,
                grid=(1,),
                in_specs=[full((B, D)), full((B, D)), full((D, D)),
                          full((1, D)), full((1, D)), full((1, D))],
                out_specs=full((B, D)),
            ),
            compiler_params=pltpu.CompilerParams(
                dimension_semantics=("arbitrary",)),
        )(x, y, wv_t, bv, gamma, beta)

    # ---------------- tiled path: phase 0 stash z, phase 1 normalize --------
    if block_b is None:
        block_b = _pick_block_b(B, D, _VMEM_BUDGET)
        if block_b is None:
            # TODO(synk): very large B*D where the z scratch does not fit VMEM
            # would need an HBM z spill or a recompute variant; not implemented.
            raise NotImplementedError(
                "batch too large for the VMEM-resident z scratch")
    assert B % block_b == 0, "batch must divide evenly into block_b tiles"
    nb = B // block_b
    last = nb - 1

    needed = _tiled_vmem_bytes(B, D, block_b)
    vmem_limit = None
    if needed > 14 * 1024 * 1024:          # above v5e's 16 MiB scoped default
        vmem_limit = int(min(needed + (4 << 20), 48 << 20))

    # Phase-gated index maps: phase 1 keeps revisiting the last x/y block (no
    # re-fetch from HBM); phase 0 keeps revisiting output block 0 (no per-tile
    # HBM writeback of placeholder data).
    xy_spec = pl.BlockSpec((block_b, D), lambda p, b: ((1 - p) * b + p * last, 0))
    out_spec = pl.BlockSpec((block_b, D), lambda p, b: (p * b, 0))
    resident = lambda shape: pl.BlockSpec(shape, lambda p, b: (0, 0))

    kernel = functools.partial(_kam_tiled_kernel, batch_size=B,
                               block_b=block_b, eps=eps)
    return pl.pallas_call(
        kernel,
        out_shape=jax.ShapeDtypeStruct((B, D), x.dtype),
        grid_spec=pltpu.PrefetchScalarGridSpec(
            num_scalar_prefetch=0,
            grid=(2, nb),                     # (phase, batch tile)
            in_specs=[
                xy_spec,                      # x
                xy_spec,                      # y
                resident((D, D)),             # Wv^T (resident in VMEM)
                resident((1, D)),             # bv
                resident((1, D)),             # gamma
                resident((1, D)),             # beta
            ],
            out_specs=out_spec,
            scratch_shapes=[
                pltpu.VMEM((B, D), jnp.float32),   # z = x - y + h stash
                pltpu.VMEM((2, D), jnp.float32),   # row0: sum -> scale, row1: shift
            ],
        ),
        compiler_params=pltpu.CompilerParams(
            # BatchNorm couples all batch tiles through the shared scratch, so
            # both axes are sequential on one TensorCore.
            dimension_semantics=("arbitrary", "arbitrary"),
            vmem_limit_bytes=vmem_limit),
    )(x, y, wv_t, bv, gamma, beta)


# ---------------------------------------------------------------------------
# Parameter init (mirrors the torch module) and pure-JAX reference
# ---------------------------------------------------------------------------

def init_params(key, n_dim):
    """Linear weights xavier_normal_, biases U(-1/sqrt(D), 1/sqrt(D));
    BatchNorm1d default gamma=1, beta=0."""
    kwk, kwv, kbk, kbv = jax.random.split(key, 4)
    std = (2.0 / (n_dim + n_dim)) ** 0.5
    wk = jax.random.normal(kwk, (n_dim, n_dim), jnp.float32) * std   # (out, in)
    wv = jax.random.normal(kwv, (n_dim, n_dim), jnp.float32) * std
    bound = 1.0 / (n_dim ** 0.5)
    bk = jax.random.uniform(kbk, (1, n_dim), jnp.float32, -bound, bound)
    bv = jax.random.uniform(kbv, (1, n_dim), jnp.float32, -bound, bound)
    gamma = jnp.ones((1, n_dim), jnp.float32)
    beta = jnp.zeros((1, n_dim), jnp.float32)
    # pre-transpose Linear weights so kernels compute x @ W^T directly
    return wk.T, bk, wv.T, bv, gamma, beta


def knowledge_aug_ref(x, y, wk_t, bk, wv_t, bv, gamma, beta, eps=1e-5):
    """Pure-JAX reference replicating the torch forward exactly (full attention
    path + training-mode BatchNorm1d)."""
    B, D = x.shape
    hp = jax.lax.Precision.HIGHEST
    q = y.reshape(-1, 1, D)
    k = (jnp.dot(x, wk_t, precision=hp) + bk).reshape(-1, 1, D)
    v = (jnp.dot(x, wv_t, precision=hp) + bv).reshape(-1, 1, D)
    qk = jnp.matmul(q, jnp.swapaxes(k, 1, 2), precision=hp)   # (B, 1, 1)
    qk = jax.nn.softmax(qk, axis=-1)
    h = jnp.matmul(qk, v, precision=hp).reshape(-1, D)
    z = x - y + h
    mu = jnp.mean(z, axis=0, keepdims=True)
    var = jnp.mean((z - mu) ** 2, axis=0, keepdims=True)       # biased (train BN)
    return gamma * (z - mu) / jnp.sqrt(var + eps) + beta


if __name__ == "__main__":
    key = jax.random.PRNGKey(0)
    kx, ky, kp, kx2, ky2, kp2 = jax.random.split(key, 6)

    # Test 1: small shapes consistent with the module -> single-step fast path.
    B, D = 64, 32
    x = jax.random.normal(kx, (B, D), jnp.float32)
    y = jax.random.normal(ky, (B, D), jnp.float32)
    wk_t, bk, wv_t, bv, gamma, beta = init_params(kp, D)

    out = jax.block_until_ready(knowledge_aug_forward(x, y, wv_t, bv, gamma, beta))
    ref = knowledge_aug_ref(x, y, wk_t, bk, wv_t, bv, gamma, beta)
    assert out.shape == (B, D)
    assert jnp.allclose(out, ref, atol=1e-4, rtol=1e-4), "fast-path mismatch"

    # Test 2: force the tiled (phase-0 stash / phase-1 normalize) path.
    B2, D2 = 256, 128
    x2 = jax.random.normal(kx2, (B2, D2), jnp.float32)
    y2 = jax.random.normal(ky2, (B2, D2), jnp.float32)
    wk2_t, bk2, wv2_t, bv2, g2, b2 = init_params(kp2, D2)

    out2 = jax.block_until_ready(
        knowledge_aug_forward(x2, y2, wv2_t, bv2, g2, b2,
                              block_b=64, force_tiled=True))
    ref2 = knowledge_aug_ref(x2, y2, wk2_t, bk2, wv2_t, bv2, g2, b2)
    assert out2.shape == (B2, D2)
    assert jnp.allclose(out2, ref2, atol=2e-3, rtol=2e-3), "tiled-path mismatch"

    print("KERNEL_OK")
</pallas_src>

<mosaic_0001>
module attributes {stable_mosaic.version = 11 : i64} {
  func.func @_kam_fast_kernel(%arg0: i32, %arg1: memref<64x32xf32, #tpu.memory_space<vmem>>, %arg2: memref<64x32xf32, #tpu.memory_space<vmem>>, %arg3: memref<32x32xf32, #tpu.memory_space<vmem>>, %arg4: memref<1x32xf32, #tpu.memory_space<vmem>>, %arg5: memref<1x32xf32, #tpu.memory_space<vmem>>, %arg6: memref<1x32xf32, #tpu.memory_space<vmem>>, %arg7: memref<64x32xf32, #tpu.memory_space<vmem>>) attributes {dimension_semantics = [#tpu.dimension_semantics<arbitrary>], iteration_bounds = array<i64: 1>, scalar_prefetch = 0 : i64, scratch_operands = 0 : i64, tpu.core_type = #tpu.core_type<tc>, window_params = [{pipeline_mode = #tpu.pipeline_mode<synchronous>, transform_indices = @transform_0, window_bounds = array<i64: 64, 32>}, {pipeline_mode = #tpu.pipeline_mode<synchronous>, transform_indices = @transform_1, window_bounds = array<i64: 64, 32>}, {pipeline_mode = #tpu.pipeline_mode<synchronous>, transform_indices = @transform_2, window_bounds = array<i64: 32, 32>}, {pipeline_mode = #tpu.pipeline_mode<synchronous>, transform_indices = @transform_3, window_bounds = array<i64: 1, 32>}, {pipeline_mode = #tpu.pipeline_mode<synchronous>, transform_indices = @transform_4, window_bounds = array<i64: 1, 32>}, {pipeline_mode = #tpu.pipeline_mode<synchronous>, transform_indices = @transform_5, window_bounds = array<i64: 1, 32>}, {pipeline_mode = #tpu.pipeline_mode<synchronous>, transform_indices = @transform_6, window_bounds = array<i64: 64, 32>}]} {
    %c0 = arith.constant 0 : index
    %c0_0 = arith.constant 0 : index
    %0 = vector.load %arg1[%c0, %c0_0] : memref<64x32xf32, #tpu.memory_space<vmem>>, vector<64x32xf32>
    %c0_1 = arith.constant 0 : index
    %c0_2 = arith.constant 0 : index
    %1 = vector.load %arg2[%c0_1, %c0_2] : memref<64x32xf32, #tpu.memory_space<vmem>>, vector<64x32xf32>
    %c0_3 = arith.constant 0 : index
    %c0_4 = arith.constant 0 : index
    %2 = vector.load %arg3[%c0_3, %c0_4] : memref<32x32xf32, #tpu.memory_space<vmem>>, vector<32x32xf32>
    %cst = arith.constant dense<0.000000e+00> : vector<64x32xf32>
    %3 = tpu.matmul %0, %2, %cst {dimension_numbers = #tpu.dot_dimension_numbers<[1], [0], [0], [1], [0, 0, 1, 1], [], []>} : vector<64x32xf32>, vector<32x32xf32>, vector<64x32xf32> -> vector<64x32xf32>
    %c0_5 = arith.constant 0 : index
    %c0_6 = arith.constant 0 : index
    %4 = vector.load %arg4[%c0_5, %c0_6] : memref<1x32xf32, #tpu.memory_space<vmem>>, vector<1x32xf32>
    %5 = vector.broadcast %4 : vector<1x32xf32> to vector<64x32xf32>
    %6 = arith.addf %3, %5 : vector<64x32xf32>
    %7 = arith.subf %0, %1 : vector<64x32xf32>
    %8 = arith.addf %7, %6 : vector<64x32xf32>
    %cst_7 = arith.constant dense<0.000000e+00> : vector<32xf32>
    %9 = vector.multi_reduction <add>, %8, %cst_7 [0] : vector<64x32xf32> to vector<32xf32>
    %10 = vector.shape_cast %9 : vector<32xf32> to vector<1x32xf32>
    %cst_8 = arith.constant 6.400000e+01 : f32
    %11 = vector.broadcast %cst_8 : f32 to vector<1x32xf32>
    %12 = arith.divf %10, %11 : vector<1x32xf32>
    %13 = vector.broadcast %12 : vector<1x32xf32> to vector<64x32xf32>
    %14 = arith.subf %8, %13 : vector<64x32xf32>
    %15 = arith.mulf %14, %14 : vector<64x32xf32>
    %cst_9 = arith.constant dense<0.000000e+00> : vector<32xf32>
    %16 = vector.multi_reduction <add>, %15, %cst_9 [0] : vector<64x32xf32> to vector<32xf32>
    %17 = vector.shape_cast %16 : vector<32xf32> to vector<1x32xf32>
    %cst_10 = arith.constant 6.400000e+01 : f32
    %18 = vector.broadcast %cst_10 : f32 to vector<1x32xf32>
    %19 = arith.divf %17, %18 : vector<1x32xf32>
    %cst_11 = arith.constant 9.99999974E-6 : f32
    %20 = vector.broadcast %cst_11 : f32 to vector<1x32xf32>
    %21 = arith.addf %19, %20 : vector<1x32xf32>
    %22 = math.rsqrt %21 : vector<1x32xf32>
    %c0_12 = arith.constant 0 : index
    %c0_13 = arith.constant 0 : index
    %23 = vector.load %arg5[%c0_12, %c0_13] : memref<1x32xf32, #tpu.memory_space<vmem>>, vector<1x32xf32>
    %24 = arith.mulf %23, %22 : vector<1x32xf32>
    %c0_14 = arith.constant 0 : index
    %c0_15 = arith.constant 0 : index
    %25 = vector.load %arg6[%c0_14, %c0_15] : memref<1x32xf32, #tpu.memory_space<vmem>>, vector<1x32xf32>
    %26 = arith.mulf %12, %24 : vector<1x32xf32>
    %27 = arith.subf %25, %26 : vector<1x32xf32>
    %28 = vector.broadcast %24 : vector<1x32xf32> to vector<64x32xf32>
    %29 = arith.mulf %8, %28 : vector<64x32xf32>
    %30 = vector.broadcast %27 : vector<1x32xf32> to vector<64x32xf32>
    %31 = arith.addf %29, %30 : vector<64x32xf32>
    %c0_16 = arith.constant 0 : index
    %c0_17 = arith.constant 0 : index
    %32 = vector.load %arg7[%c0_16, %c0_17] : memref<64x32xf32, #tpu.memory_space<vmem>>, vector<64x32xf32>
    tpu.vector_store %arg7[%c0_16, %c0_17], %31 {strides = array<i32>} : memref<64x32xf32, #tpu.memory_space<vmem>>, vector<64x32xf32>,
    return
  }
  func.func @transform_0(%arg0: i32) -> (i32, i32) {
    %c0_i32 = arith.constant 0 : i32
    %c0_i32_0 = arith.constant 0 : i32
    %c0_i32_1 = arith.constant 0 : i32
    return %c0_i32, %c0_i32_0 : i32, i32
  }
  func.func @transform_1(%arg0: i32) -> (i32, i32) {
    %c0_i32 = arith.constant 0 : i32
    %c0_i32_0 = arith.constant 0 : i32
    %c0_i32_1 = arith.constant 0 : i32
    return %c0_i32, %c0_i32_0 : i32, i32
  }
  func.func @transform_2(%arg0: i32) -> (i32, i32) {
    %c0_i32 = arith.constant 0 : i32
    %c0_i32_0 = arith.constant 0 : i32
    %c0_i32_1 = arith.constant 0 : i32
    return %c0_i32, %c0_i32_0 : i32, i32
  }
  func.func @transform_3(%arg0: i32) -> (i32, i32) {
    %c0_i32 = arith.constant 0 : i32
    %c0_i32_0 = arith.constant 0 : i32
    %c0_i32_1 = arith.constant 0 : i32
    return %c0_i32, %c0_i32_0 : i32, i32
  }
  func.func @transform_4(%arg0: i32) -> (i32, i32) {
    %c0_i32 = arith.constant 0 : i32
    %c0_i32_0 = arith.constant 0 : i32
    %c0_i32_1 = arith.constant 0 : i32
    return %c0_i32, %c0_i32_0 : i32, i32
  }
  func.func @transform_5(%arg0: i32) -> (i32, i32) {
    %c0_i32 = arith.constant 0 : i32
    %c0_i32_0 = arith.constant 0 : i32
    %c0_i32_1 = arith.constant 0 : i32
    return %c0_i32, %c0_i32_0 : i32, i32
  }
  func.func @transform_6(%arg0: i32) -> (i32, i32) {
    %c0_i32 = arith.constant 0 : i32
    %c0_i32_0 = arith.constant 0 : i32
    %c0_i32_1 = arith.constant 0 : i32
    return %c0_i32, %c0_i32_0 : i32, i32
  }
}

</mosaic_0001>

<llo_original>
// kernel: tpu_custom_call.1
$region0: #{tpu_custom_call.1}
  #allocation0 [shape = 'u32[]', space=smem, size = 0x4, offset = 0x4, fixed_abs, tag = 'smem constant byte address 0x4 - core index']
  #allocation1 [shape = 'u32[144,128]{1,0:T(1,128)}', space=vmem, size = 0x12000, scoped, tag = 'internal scratch']
  %s0 = inlined_call_operand.vmem [shape: f32[64,32], index: 0, kind: input, shape index: {}]
  %s1 = inlined_call_operand.vmem [shape: f32[64,32], index: 1, kind: input, shape index: {}]
  %s2 = inlined_call_operand.vmem [shape: f32[32,32], index: 2, kind: input, shape index: {}]
  %s3 = inlined_call_operand.vmem [shape: f32[1,32], index: 3, kind: input, shape index: {}]
  %s4 = inlined_call_operand.vmem [shape: f32[1,32], index: 4, kind: input, shape index: {}]
  %s5 = inlined_call_operand.vmem [shape: f32[1,32], index: 5, kind: input, shape index: {}]
  %s6 = inlined_call_operand.vmem [shape: f32[64,32], index: 6, kind: output, shape index: {}]
  %s7 = sld [smem:[#allocation0]]
  $region34: #{tpu_custom_call.1} parent=0
    _
  %s9 = ssub.s32 1, %s7
  %s10 = scalar_select 0, %s9, %s7
  // Predicated region
  $region2: #{tpu_custom_call.1} parent=0 // pred_check
    _
  $region3: #{tpu_custom_call.1} parent=0 // pred_check_branch
    %12 = sbr.rel (0) target = $region5
  $region4: #{tpu_custom_call.1} parent=0 // pred_region
    _
  $region5: #{tpu_custom_call.1} parent=0 // pred_fallthru
    _
  // Predicated region
  $region6: #{tpu_custom_call.1} parent=0 // pred_check
    _
  $region7: #{tpu_custom_call.1} parent=0 // pred_check_branch
    %14 = sbr.rel (0) target = $region9
  $region8: #{tpu_custom_call.1} parent=0 // pred_region
    _
  $region9: #{tpu_custom_call.1} parent=0 // pred_fallthru
    _
  // Predicated region
  $region10: #{tpu_custom_call.1} parent=0 // pred_check
    _
  $region11: #{tpu_custom_call.1} parent=0 // pred_check_branch
    %16 = sbr.rel (0) target = $region13
  $region12: #{tpu_custom_call.1} parent=0 // pred_region
    _
  $region13: #{tpu_custom_call.1} parent=0 // pred_fallthru
    _
  // Predicated region
  $region14: #{tpu_custom_call.1} parent=0 // pred_check
    _
  $region15: #{tpu_custom_call.1} parent=0 // pred_check_branch
    %18 = sbr.rel (0) target = $region17
  $region16: #{tpu_custom_call.1} parent=0 // pred_region
    _
  $region17: #{tpu_custom_call.1} parent=0 // pred_fallthru
    _
  // Predicated region
  $region18: #{tpu_custom_call.1} parent=0 // pred_check
    _
  $region19: #{tpu_custom_call.1} parent=0 // pred_check_branch
    %20 = sbr.rel (0) target = $region21
  $region20: #{tpu_custom_call.1} parent=0 // pred_region
    _
  $region21: #{tpu_custom_call.1} parent=0 // pred_fallthru
    _
  // Predicated region
  $region22: #{tpu_custom_call.1} parent=0 // pred_check
    _
  $region23: #{tpu_custom_call.1} parent=0 // pred_check_branch
    %22 = sbr.rel (0) target = $region25
  $region24: #{tpu_custom_call.1} parent=0 // pred_region
    _
  $region25: #{tpu_custom_call.1} parent=0 // pred_fallthru
    _
  %v23 = vld [vmem:[%s0] sm:$0xff]
  %v24 = vld [vmem:[%s0 + $0x8] sm:$0xff]
  %v25 = vld [vmem:[%s0 + $0x10] sm:$0xff]
  %v26 = vld [vmem:[%s0 + $0x18] sm:$0xff]
  %v27 = vld [vmem:[%s0 + $0x20] sm:$0xff]
  %v28 = vld [vmem:[%s0 + $0x28] sm:$0xff]
  %v29 = vld [vmem:[%s0 + $0x30] sm:$0xff]
  %v30 = vld [vmem:[%s0 + $0x38] sm:$0xff]
  %v31 = vld [vmem:[%s1] sm:$0xff]
  %v32 = vld [vmem:[%s1 + $0x8] sm:$0xff]
  %v33 = vld [vmem:[%s1 + $0x10] sm:$0xff]
  %v34 = vld [vmem:[%s1 + $0x18] sm:$0xff]
  %v35 = vld [vmem:[%s1 + $0x20] sm:$0xff]
  %v36 = vld [vmem:[%s1 + $0x28] sm:$0xff]
  %v37 = vld [vmem:[%s1 + $0x30] sm:$0xff]
  %v38 = vld [vmem:[%s1 + $0x38] sm:$0xff]
  %v39 = vld [vmem:[%s2] sm:$0xff]
  %v40 = vld [vmem:[%s2 + $0x8] sm:$0xff]
  %v41 = vld [vmem:[%s2 + $0x10] sm:$0xff]
  %v42 = vld [vmem:[%s2 + $0x18] sm:$0xff]
  %v43 = vld [vmem:[%s3] sm:$0x1]
  %v45 = vlaneseq
  %v46 = vshrl.u32 %v45, 7
  %v47 = vsub.s32 0, %v46
  %v48 = vrot.slane %v43, %v47
  %vm50 = vcmask 261120
  %v52 = vsel %vm50, %v23, 0
  %v55 = vsel %vm50, %v24, 0
  %v58 = vsel %vm50, %v25, 0
  %v61 = vsel %vm50, %v26, 0
  %v64 = vsel %vm50, %v27, 0
  %v67 = vsel %vm50, %v28, 0
  %v70 = vsel %vm50, %v29, 0
  %v73 = vsel %vm50, %v30, 0
  %75 = vmatprep.subr.mxu0 0.0
  %76 = vmatpush1.msra.mxu0 %v39
  %77 = vmatprep.subr.mxu0 0.0
  %78 = vmatpush1.msra.mxu0 %v40
  %79 = vmatprep.subr.mxu0 0.0
  %80 = vmatpush1.msra.mxu0 %v41
  %81 = vmatprep.subr.mxu0 0.0
  %82 = vmatpush1.msra.mxu0 %v42
  %83 = vmatprep.subr.mxu0 0.0
  %84 = vmatpush1.msra.mxu0 0.0
  %85 = vmatprep.subr.mxu0 0.0
  %86 = vmatpush1.msra.mxu0 0.0
  %87 = vmatprep.subr.mxu0 0.0
  %88 = vmatpush1.msra.mxu0 0.0
  %89 = vmatprep.subr.mxu0 0.0
  %90 = vmatpush1.msra.mxu0 0.0
  %91 = vmatprep.subr.mxu0 0.0
  %92 = vmatpush1.msra.mxu0 0.0
  %93 = vmatprep.subr.mxu0 0.0
  %94 = vmatpush1.msra.mxu0 0.0
  %95 = vmatprep.subr.mxu0 0.0
  %96 = vmatpush1.msra.mxu0 0.0
  %97 = vmatprep.subr.mxu0 0.0
  %98 = vmatpush1.msra.mxu0 0.0
  %99 = vmatprep.subr.mxu0 0.0
  %100 = vmatpush1.msra.mxu0 0.0
  %101 = vmatprep.subr.mxu0 0.0
  %102 = vmatpush1.msra.mxu0 0.0
  %103 = vmatprep.subr.mxu0 0.0
  %104 = vmatpush1.msra.mxu0 0.0
  %105 = vmatprep.subr.mxu0 0.0
  %106 = vmatpush1.msra.mxu0 0.0
  %107 = vmatprep.subr.mxu0 0.0
  %108 = vmatpush1.msra.mxu0 0.0
  %109 = vmatprep.subr.mxu0 0.0
  %110 = vmatpush1.msra.mxu0 0.0
  %111 = vmatprep.subr.mxu0 0.0
  %112 = vmatpush1.msra.mxu0 0.0
  %113 = vmatprep.subr.mxu0 0.0
  %114 = vmatpush1.msra.mxu0 0.0
  %115 = vmatprep.subr.mxu0 0.0
  %116 = vmatpush1.msra.mxu0 0.0
  %117 = vmatprep.subr.mxu0 0.0
  %118 = vmatpush1.msra.mxu0 0.0
  %119 = vmatprep.subr.mxu0 0.0
  %120 = vmatpush1.msra.mxu0 0.0
  %121 = vmatprep.subr.mxu0 0.0
  %122 = vmatpush1.msra.mxu0 0.0
  %123 = vmatprep.subr.mxu0 0.0
  %124 = vmatpush1.msra.mxu0 0.0
  %125 = vmatprep.subr.mxu0 0.0
  %126 = vmatpush1.msra.mxu0 0.0
  %127 = vmatprep.subr.mxu0 0.0
  %128 = vmatpush1.msra.mxu0 0.0
  %129 = vmatprep.subr.mxu0 0.0
  %130 = vmatpush1.msra.mxu0 0.0
  %131 = vmatprep.subr.mxu0 0.0
  %132 = vmatpush1.msra.mxu0 0.0
  %133 = vmatprep.subr.mxu0 0.0
  %134 = vmatpush1.msra.mxu0 0.0
  %135 = vmatprep.subr.mxu0 0.0
  %136 = vmatpush1.msra.mxu0 0.0
  %137 = vmatprep.subr.mxu0 0.0
  %138 = vmatpush1.msra.mxu0 0.0
  %139 = vmatprep.mubr.f32.mxu0 0.0
  %140 = vmatmul.mubr.f32.gmra.mrb[0].mxu0 %v52
  %v141 = vpop.f32.mrb[0].mxu0
  %v142 = vadd.f32 %v48, %v141
  %v143 = vpop.f32.mrb[0].mxu0
  %144 = vmatprep.mubr.f32.mxu0 0.0
  %145 = vmatmul.mubr.f32.gmra.mrb[0].mxu0 %v55
  %v146 = vpop.f32.mrb[0].mxu0
  %v147 = vadd.f32 %v48, %v146
  %v148 = vpop.f32.mrb[0].mxu0
  %149 = vmatprep.mubr.f32.mxu0 0.0
  %150 = vmatmul.mubr.f32.gmra.mrb[0].mxu0 %v58
  %v151 = vpop.f32.mrb[0].mxu0
  %v152 = vadd.f32 %v48, %v151
  %v153 = vpop.f32.mrb[0].mxu0
  %154 = vmatprep.mubr.f32.mxu0 0.0
  %155 = vmatmul.mubr.f32.gmra.mrb[0].mxu0 %v61
  %v156 = vpop.f32.mrb[0].mxu0
  %v157 = vadd.f32 %v48, %v156
  %v158 = vpop.f32.mrb[0].mxu0
  %159 = vmatprep.mubr.f32.mxu0 0.0
  %160 = vmatmul.mubr.f32.gmra.mrb[0].mxu0 %v64
  %v161 = vpop.f32.mrb[0].mxu0
  %v162 = vadd.f32 %v48, %v161
  %v163 = vpop.f32.mrb[0].mxu0
  %164 = vmatprep.mubr.f32.mxu0 0.0
  %165 = vmatmul.mubr.f32.gmra.mrb[0].mxu0 %v67
  %v166 = vpop.f32.mrb[0].mxu0
  %v167 = vadd.f32 %v48, %v166
  %v168 = vpop.f32.mrb[0].mxu0
  %169 = vmatprep.mubr.f32.mxu0 0.0
  %170 = vmatmul.mubr.f32.gmra.mrb[0].mxu0 %v70
  %v171 = vpop.f32.mrb[0].mxu0
  %v172 = vadd.f32 %v48, %v171
  %v173 = vpop.f32.mrb[0].mxu0
  %174 = vmatprep.mubr.f32.mxu0 0.0
  %175 = vmatmul.mubr.f32.gmra.mrb[0].mxu0 %v73
  %v176 = vpop.f32.mrb[0].mxu0
  %v177 = vadd.f32 %v48, %v176
  %v178 = vpop.f32.mrb[0].mxu0
  %179 = vdwg.mxu0
  %v180 = vsub.f32 %v23, %v31
  %v181 = vsub.f32 %v24, %v32
  %v182 = vsub.f32 %v25, %v33
  %v183 = vsub.f32 %v26, %v34
  %v184 = vsub.f32 %v27, %v35
  %v185 = vsub.f32 %v28, %v36
  %v186 = vsub.f32 %v29, %v37
  %v187 = vsub.f32 %v30, %v38
  %v188 = vadd.f32 %v180, %v142
  %v189 = vadd.f32 %v181, %v147
  %v190 = vadd.f32 %v182, %v152
  %v191 = vadd.f32 %v183, %v157
  %v192 = vadd.f32 %v184, %v162
  %v193 = vadd.f32 %v185, %v167
  %v194 = vadd.f32 %v186, %v172
  %v195 = vadd.f32 %v187, %v177
  %v196 = vsel %vm50, %v188, 0.0
  %v197 = vsel %vm50, %v189, 0.0
  %v198 = vadd.f32 %v196, %v197
  %v199 = vsel %vm50, %v190, 0.0
  %v200 = vadd.f32 %v198, %v199
  %v201 = vsel %vm50, %v191, 0.0
  %v202 = vadd.f32 %v200, %v201
  %v203 = vsel %vm50, %v192, 0.0
  %v204 = vadd.f32 %v202, %v203
  %v205 = vsel %vm50, %v193, 0.0
  %v206 = vadd.f32 %v204, %v205
  %v207 = vsel %vm50, %v194, 0.0
  %v208 = vadd.f32 %v206, %v207
  %v209 = vsel %vm50, %v195, 0.0
  %v210 = vadd.f32 %v208, %v209
  %v211 = vrot.slane %v210, 4
  %v212 = vadd.f32 %v210, %v211
  %v213 = vrot.slane %v212, 2
  %v214 = vadd.f32 %v212, %v213
  %v215 = vrot.slane %v214, 1
  %v216 = vadd.f32 %v214, %v215
  %v217 = vrcp.pop 64.0
  %v218 = vmul.f32 %v216, %v217
  %v219 = vsub.f32 %v188, %v218
  %v220 = vsub.f32 %v189, %v218
  %v221 = vsub.f32 %v190, %v218
  %v222 = vsub.f32 %v191, %v218
  %v223 = vsub.f32 %v192, %v218
  %v224 = vsub.f32 %v193, %v218
  %v225 = vsub.f32 %v194, %v218
  %v226 = vsub.f32 %v195, %v218
  %v227 = vmul.f32 %v219, %v219
  %v228 = vmul.f32 %v220, %v220
  %v229 = vmul.f32 %v221, %v221
  %v230 = vmul.f32 %v222, %v222
  %v231 = vmul.f32 %v223, %v223
  %v232 = vmul.f32 %v224, %v224
  %v233 = vmul.f32 %v225, %v225
  %v234 = vmul.f32 %v226, %v226
  %v235 = vsel %vm50, %v227, 0.0
  %v236 = vsel %vm50, %v228, 0.0
  %v237 = vadd.f32 %v235, %v236
  %v238 = vsel %vm50, %v229, 0.0
  %v239 = vadd.f32 %v237, %v238
  %v240 = vsel %vm50, %v230, 0.0
  %v241 = vadd.f32 %v239, %v240
  %v242 = vsel %vm50, %v231, 0.0
  %v243 = vadd.f32 %v241, %v242
  %v244 = vsel %vm50, %v232, 0.0
  %v245 = vadd.f32 %v243, %v244
  %v246 = vsel %vm50, %v233, 0.0
  %v247 = vadd.f32 %v245, %v246
  %v248 = vsel %vm50, %v234, 0.0
  %v249 = vadd.f32 %v247, %v248
  %v250 = vrot.slane %v249, 4
  %v251 = vadd.f32 %v249, %v250
  %v252 = vrot.slane %v251, 2
  %v253 = vadd.f32 %v251, %v252
  %v254 = vrot.slane %v253, 1
  %v255 = vadd.f32 %v253, %v254
  %v256 = vmul.f32 %v255, %v217
  %v257 = vadd.f32 %v256, 1e-05
  %v258 = vrsqrt.pop %v257
  %v259 = vld [vmem:[%s4] sm:$0x1]
  %v260 = vmul.f32 %v259, %v258
  %v261 = vld [vmem:[%s5] sm:$0x1]
  %v262 = vmul.f32 %v218, %v260
  %v263 = vsub.f32 %v261, %v262
  %v265 = vlaneseq
  %v266 = vshrl.u32 %v265, 7
  %v267 = vsub.s32 0, %v266
  %v268 = vrot.slane %v260, %v267
  %v270 = vmul.f32 %v188, %v268
  %v271 = vmul.f32 %v189, %v268
  %v272 = vmul.f32 %v190, %v268
  %v273 = vmul.f32 %v191, %v268
  %v274 = vmul.f32 %v192, %v268
  %v275 = vmul.f32 %v193, %v268
  %v276 = vmul.f32 %v194, %v268
  %v277 = vmul.f32 %v195, %v268
  %v279 = vlaneseq
  %v280 = vshrl.u32 %v279, 7
  %v281 = vsub.s32 0, %v280
  %v282 = vrot.slane %v263, %v281
  %v284 = vadd.f32 %v270, %v282
  %v285 = vadd.f32 %v271, %v282
  %v286 = vadd.f32 %v272, %v282
  %v287 = vadd.f32 %v273, %v282
  %v288 = vadd.f32 %v274, %v282
  %v289 = vadd.f32 %v275, %v282
  %v290 = vadd.f32 %v276, %v282
  %v291 = vadd.f32 %v277, %v282
  %292 = vst.msk [vmem:[%s6] sm:$0xff] %vm50, %v284
  %293 = vst.msk [vmem:[%s6 + $0x8] sm:$0xff] %vm50, %v285
  %294 = vst.msk [vmem:[%s6 + $0x10] sm:$0xff] %vm50, %v286
  %295 = vst.msk [vmem:[%s6 + $0x18] sm:$0xff] %vm50, %v287
  %296 = vst.msk [vmem:[%s6 + $0x20] sm:$0xff] %vm50, %v288
  %297 = vst.msk [vmem:[%s6 + $0x28] sm:$0xff] %vm50, %v289
  %298 = vst.msk [vmem:[%s6 + $0x30] sm:$0xff] %vm50, %v290
  %299 = vst.msk [vmem:[%s6 + $0x38] sm:$0xff] %vm50, %v291
  // Predicated region
  $region26: #{tpu_custom_call.1} parent=0 // pred_check
    _
  $region27: #{tpu_custom_call.1} parent=0 // pred_check_branch
    %301 = sbr.rel (0) target = $region29
  $region28: #{tpu_custom_call.1} parent=0 // pred_region
    _
  $region29: #{tpu_custom_call.1} parent=0 // pred_fallthru
    _
  // Predicated region
  $region30: #{tpu_custom_call.1} parent=0 // pred_check
    _
  $region31: #{tpu_custom_call.1} parent=0 // pred_check_branch
    %303 = sbr.rel (0) target = $region33
  $region32: #{tpu_custom_call.1} parent=0 // pred_region
    _
  $region33: #{tpu_custom_call.1} parent=0 // pred_fallthru
    _

</llo_original>
